<compile_context>
chip_gen: v6e
topology: v6e:2x2x1
jax: 0.10.0
libtpu: 0.0.40
codegen_flags: <defaults>
</compile_context>

<pallas_src>
import jax
import jax.numpy as jnp
from jax.experimental import pallas as pl
from jax.experimental.pallas import tpu as pltpu


def _round_up(x: int, m: int) -> int:
    return ((x + m - 1) // m) * m


def _head_kernel(x_ref, w1_ref, b1_ref, w2_ref, b2_ref, o_ref):
    # x_ref:  (TB, D)       block of hidden_states (compute dtype)
    # w1_ref: (D, 256)      dense weight    (compute dtype)
    # b1_ref: (1, 256)      dense bias      (f32)
    # w2_ref: (256, Cp)     out_proj weight (compute dtype, lane-padded)
    # b2_ref: (1, Cp)       out_proj bias   (f32, lane-padded)
    # o_ref:  (TB, Cp)      logits block
    h = jnp.dot(x_ref[...], w1_ref[...],
                preferred_element_type=jnp.float32) + b1_ref[...]
    # Dropout(p=0.1) is the identity in eval/inference mode.
    # No tanh: the spec module is dense -> dropout -> out_proj only.
    # TODO(synk): training-mode dropout masking (pltpu.prng_random_bits) not wired in.
    out = jnp.dot(h.astype(w2_ref.dtype), w2_ref[...],
                  preferred_element_type=jnp.float32) + b2_ref[...]
    o_ref[...] = out.astype(o_ref.dtype)


def prepare_head_params(w1, b1, w2, b2, compute_dtype=jnp.bfloat16):
    """One-time parameter prep (do this OUTSIDE the per-forward path).

    * casts w1/w2 to the matmul compute dtype (bf16 by default, None = keep f32)
    * lane-pads num_classes up to 128 so the output tile uses full 128-lane stores
    * keeps biases in f32 (added to the f32 MXU accumulator)
    """
    D, H = w1.shape                       # H == 256
    C = w2.shape[1]                       # num_classes
    C_pad = _round_up(max(C, 128), 128)   # exactly 128 for C <= 128 (don't over-pad)
    if C_pad != C:
        w2 = jnp.pad(w2, ((0, 0), (0, C_pad - C)))
        b2 = jnp.pad(b2.reshape(1, C), ((0, 0), (0, C_pad - C)))
    else:
        b2 = b2.reshape(1, C_pad)
    b1 = b1.reshape(1, H)
    if compute_dtype is not None:
        w1 = w1.astype(compute_dtype)
        w2 = w2.astype(compute_dtype)
    # TODO(synk): optional fp8 weight path on v7x (halves the dominant w1 DMA again).
    return {
        "w1": w1, "b1": b1.astype(jnp.float32),
        "w2": w2, "b2": b2.astype(jnp.float32),
        "num_classes": C, "compute_dtype": compute_dtype,
    }


def bart_classification_head(x, params, *, block_batch=None, out_dtype=None):
    """x: [B, input_dim] -> logits [B, num_classes] using pre-prepared params."""
    B, D = x.shape
    w1, b1, w2, b2 = params["w1"], params["b1"], params["w2"], params["b2"]
    C = params["num_classes"]
    compute_dtype = params["compute_dtype"]
    assert w1.shape[0] == D, "input_dim mismatch between x and prepared params"
    H = w1.shape[1]
    C_pad = w2.shape[1]

    out_dtype = x.dtype if out_dtype is None else out_dtype
    x_c = x.astype(compute_dtype) if compute_dtype is not None else x
    cd_bytes = jnp.dtype(x_c.dtype).itemsize
    out_bytes = jnp.dtype(out_dtype).itemsize

    # --- batch tiling ---------------------------------------------------------
    # Small/medium B (typical classification head): single grid step, whole
    # batch as one tile.  Splitting a tiny batch only under-fills the MXU and
    # adds per-step pipeline overhead; on v7x it would also duplicate the
    # grid-invariant weight DMA into both TensorCores.  Split only when the
    # x-stream dominates the weight traffic (B >> H=256) and each tile keeps
    # M >= 128 for the MXU.
    if block_batch is None:
        if B < 1024:
            block_batch = B            # full-dim block: no (8,128) constraint, no pad
        else:
            for cand in (512, 256, 384, 128):   # prefer a divisor of B -> no tail tile
                if B % cand == 0:
                    block_batch = cand
                    break
            else:
                block_batch = 512      # tail tile handled by Pallas boundary masking
    else:
        block_batch = int(block_batch)
        if block_batch >= B:
            block_batch = B
        else:
            block_batch = max(16, _round_up(block_batch, 16))  # bf16 sublane packing

    grid_steps = pl.cdiv(B, block_batch)
    grid = (grid_steps,)

    # Grid-invariant weights/biases: single buffer.  x: 1 buffer for a 1-step
    # grid (nothing to overlap), 3 buffers for long grids (HBM-stream bound;
    # hides DMA ramp/jitter), default 2 otherwise.
    const_buf = pl.Buffered(1)
    if grid_steps == 1:
        x_buf, x_bufs = pl.Buffered(1), 1
    elif grid_steps >= 4:
        x_buf, x_bufs = pl.Buffered(3), 3
    else:
        x_buf, x_bufs = None, 2

    # VMEM budget: request ~2x the estimate, capped well below v7x's 64 MiB.
    vmem_est = (x_bufs * block_batch * D * cd_bytes
                + 2 * block_batch * C_pad * out_bytes
                + D * H * cd_bytes + H * C_pad * cd_bytes
                + (H + C_pad) * 4
                + block_batch * max(H, C_pad) * 4)          # f32 intermediates
    vmem_limit = int(min(48 * 2**20, max(4 * 2**20, 2 * vmem_est)))

    cost = pl.CostEstimate(
        flops=int(2 * B * D * H + 2 * B * H * C_pad),
        transcendentals=0,
        bytes_accessed=int(B * D * cd_bytes + D * H * cd_bytes
                           + H * C_pad * cd_bytes + (H + C_pad) * 4
                           + B * C_pad * out_bytes),
    )

    if x_buf is None:
        x_spec = pl.BlockSpec((block_batch, D), lambda i: (i, 0))
    else:
        x_spec = pl.BlockSpec((block_batch, D), lambda i: (i, 0),
                              pipeline_mode=x_buf)

    out_padded = pl.pallas_call(
        _head_kernel,
        out_shape=jax.ShapeDtypeStruct((B, C_pad), out_dtype),
        grid_spec=pltpu.PrefetchScalarGridSpec(
            num_scalar_prefetch=0,
            grid=grid,
            in_specs=[
                x_spec,                                                  # x tile
                pl.BlockSpec((D, H), lambda i: (0, 0),
                             pipeline_mode=const_buf),                   # dense W
                pl.BlockSpec((1, H), lambda i: (0, 0),
                             pipeline_mode=const_buf),                   # dense b
                pl.BlockSpec((H, C_pad), lambda i: (0, 0),
                             pipeline_mode=const_buf),                   # out_proj W
                pl.BlockSpec((1, C_pad), lambda i: (0, 0),
                             pipeline_mode=const_buf),                   # out_proj b
            ],
            out_specs=pl.BlockSpec((block_batch, C_pad), lambda i: (i, 0)),
        ),
        compiler_params=pltpu.CompilerParams(
            dimension_semantics=("parallel",) if grid_steps > 1 else ("arbitrary",),
            vmem_limit_bytes=vmem_limit),
        cost_estimate=cost,
    )(x_c, w1, b1, w2, b2)

    return out_padded[:, :C]


def reference(x, w1, b1, w2, b2):
    h = x @ w1 + b1
    return h @ w2 + b2


if __name__ == "__main__":
    # Small shapes consistent with the module.
    batch = 16
    input_dim = 32
    hidden = 256          # fixed by the module (Linear(input_dim, 256))
    num_classes = 8

    key = jax.random.PRNGKey(0)
    kx, kw1, kb1, kw2, kb2 = jax.random.split(key, 5)

    x = jax.random.normal(kx, (batch, input_dim), dtype=jnp.float32)
    # Deterministic synthetic parameters (stored as [in, out]).
    w1 = jax.random.normal(kw1, (input_dim, hidden), dtype=jnp.float32) * 0.02
    b1 = jax.random.normal(kb1, (1, hidden), dtype=jnp.float32) * 0.02
    w2 = jax.random.normal(kw2, (hidden, num_classes), dtype=jnp.float32) * 0.02
    b2 = jax.random.normal(kb2, (1, num_classes), dtype=jnp.float32) * 0.02

    ref = reference(x, w1, b1, w2, b2)

    # f32 path (tight tolerance vs. the f32 reference).  Params prepared once.
    params_f32 = prepare_head_params(w1, b1, w2, b2, compute_dtype=None)
    out_f32 = jax.block_until_ready(bart_classification_head(x, params_f32))
    assert out_f32.shape == (batch, num_classes)
    assert jnp.allclose(out_f32, ref, atol=1e-4, rtol=1e-4), "f32 mismatch vs reference"

    # Default bf16 path (weights pre-converted once; f32 accumulation) — looser tolerance.
    params_bf16 = prepare_head_params(w1, b1, w2, b2)  # bf16 default
    out_bf16 = jax.block_until_ready(bart_classification_head(x, params_bf16))
    assert out_bf16.shape == (batch, num_classes)
    assert jnp.allclose(out_bf16, ref, atol=3e-2, rtol=3e-2), "bf16 mismatch vs reference"

    # Odd batch: exercises the full-dim single-tile path (B not a multiple of 8).
    x_odd = x[:5]
    out_odd = jax.block_until_ready(bart_classification_head(x_odd, params_f32))
    assert out_odd.shape == (5, num_classes)
    assert jnp.allclose(out_odd, reference(x_odd, w1, b1, w2, b2),
                        atol=1e-4, rtol=1e-4), "odd-batch mismatch vs reference"

    print("KERNEL_OK")
</pallas_src>

<mosaic_0001>
module attributes {stable_mosaic.version = 11 : i64} {
  func.func @_head_kernel(%arg0: i32, %arg1: memref<16x32xf32, #tpu.memory_space<vmem>>, %arg2: memref<32x256xf32, #tpu.memory_space<vmem>>, %arg3: memref<1x256xf32, #tpu.memory_space<vmem>>, %arg4: memref<256x128xf32, #tpu.memory_space<vmem>>, %arg5: memref<1x128xf32, #tpu.memory_space<vmem>>, %arg6: memref<16x128xf32, #tpu.memory_space<vmem>>) attributes {dimension_semantics = [#tpu.dimension_semantics<arbitrary>], iteration_bounds = array<i64: 1>, scalar_prefetch = 0 : i64, scratch_operands = 0 : i64, tpu.core_type = #tpu.core_type<tc>, window_params = [{pipeline_mode = #tpu.pipeline_mode<synchronous>, transform_indices = @transform_0, window_bounds = array<i64: 16, 32>}, {pipeline_mode = #tpu.pipeline_mode<synchronous>, transform_indices = @transform_1, window_bounds = array<i64: 32, 256>}, {pipeline_mode = #tpu.pipeline_mode<synchronous>, transform_indices = @transform_2, window_bounds = array<i64: 1, 256>}, {pipeline_mode = #tpu.pipeline_mode<synchronous>, transform_indices = @transform_3, window_bounds = array<i64: 256, 128>}, {pipeline_mode = #tpu.pipeline_mode<synchronous>, transform_indices = @transform_4, window_bounds = array<i64: 1, 128>}, {transform_indices = @transform_5, window_bounds = array<i64: 16, 128>}]} {
    %c0 = arith.constant 0 : index
    %c0_0 = arith.constant 0 : index
    %0 = vector.load %arg1[%c0, %c0_0] : memref<16x32xf32, #tpu.memory_space<vmem>>, vector<16x32xf32>
    %c0_1 = arith.constant 0 : index
    %c0_2 = arith.constant 0 : index
    %1 = vector.load %arg2[%c0_1, %c0_2] : memref<32x256xf32, #tpu.memory_space<vmem>>, vector<32x256xf32>
    %cst = arith.constant dense<0.000000e+00> : vector<16x256xf32>
    %2 = tpu.matmul %0, %1, %cst {dimension_numbers = #tpu.dot_dimension_numbers<[1], [0], [0], [1], [0, 0, 1, 1], [], []>} : vector<16x32xf32>, vector<32x256xf32>, vector<16x256xf32> -> vector<16x256xf32>
    %c0_3 = arith.constant 0 : index
    %c0_4 = arith.constant 0 : index
    %3 = vector.load %arg3[%c0_3, %c0_4] : memref<1x256xf32, #tpu.memory_space<vmem>>, vector<1x256xf32>
    %4 = vector.broadcast %3 : vector<1x256xf32> to vector<16x256xf32>
    %5 = arith.addf %2, %4 : vector<16x256xf32>
    %c0_5 = arith.constant 0 : index
    %c0_6 = arith.constant 0 : index
    %6 = vector.load %arg4[%c0_5, %c0_6] : memref<256x128xf32, #tpu.memory_space<vmem>>, vector<256x128xf32>
    %cst_7 = arith.constant dense<0.000000e+00> : vector<16x128xf32>
    %7 = tpu.matmul %5, %6, %cst_7 {dimension_numbers = #tpu.dot_dimension_numbers<[1], [0], [0], [1], [0, 0, 1, 1], [], []>} : vector<16x256xf32>, vector<256x128xf32>, vector<16x128xf32> -> vector<16x128xf32>
    %c0_8 = arith.constant 0 : index
    %c0_9 = arith.constant 0 : index
    %8 = vector.load %arg5[%c0_8, %c0_9] : memref<1x128xf32, #tpu.memory_space<vmem>>, vector<1x128xf32>
    %9 = vector.broadcast %8 : vector<1x128xf32> to vector<16x128xf32>
    %10 = arith.addf %7, %9 : vector<16x128xf32>
    %c0_10 = arith.constant 0 : index
    %c0_11 = arith.constant 0 : index
    %11 = vector.load %arg6[%c0_10, %c0_11] : memref<16x128xf32, #tpu.memory_space<vmem>>, vector<16x128xf32>
    tpu.vector_store %arg6[%c0_10, %c0_11], %10 {strides = array<i32>} : memref<16x128xf32, #tpu.memory_space<vmem>>, vector<16x128xf32>,
    return
  }
  func.func @transform_0(%arg0: i32) -> (i32, i32) {
    %c0_i32 = arith.constant 0 : i32
    %c0_i32_0 = arith.constant 0 : i32
    return %arg0, %c0_i32 : i32, i32
  }
  func.func @transform_1(%arg0: i32) -> (i32, i32) {
    %c0_i32 = arith.constant 0 : i32
    %c0_i32_0 = arith.constant 0 : i32
    %c0_i32_1 = arith.constant 0 : i32
    return %c0_i32, %c0_i32_0 : i32, i32
  }
  func.func @transform_2(%arg0: i32) -> (i32, i32) {
    %c0_i32 = arith.constant 0 : i32
    %c0_i32_0 = arith.constant 0 : i32
    %c0_i32_1 = arith.constant 0 : i32
    return %c0_i32, %c0_i32_0 : i32, i32
  }
  func.func @transform_3(%arg0: i32) -> (i32, i32) {
    %c0_i32 = arith.constant 0 : i32
    %c0_i32_0 = arith.constant 0 : i32
    %c0_i32_1 = arith.constant 0 : i32
    return %c0_i32, %c0_i32_0 : i32, i32
  }
  func.func @transform_4(%arg0: i32) -> (i32, i32) {
    %c0_i32 = arith.constant 0 : i32
    %c0_i32_0 = arith.constant 0 : i32
    %c0_i32_1 = arith.constant 0 : i32
    return %c0_i32, %c0_i32_0 : i32, i32
  }
  func.func @transform_5(%arg0: i32) -> (i32, i32) {
    %c0_i32 = arith.constant 0 : i32
    %c0_i32_0 = arith.constant 0 : i32
    return %arg0, %c0_i32 : i32, i32
  }
}

</mosaic_0001>

<llo_original>
// kernel: tpu_custom_call.1
$region0: #{tpu_custom_call.1}
  #allocation0 [shape = 'u32[]', space=smem, size = 0x4, offset = 0x4, fixed_abs, tag = 'smem constant byte address 0x4 - core index']
  #allocation1 [shape = 'u32[144,128]{1,0:T(1,128)}', space=vmem, size = 0x12000, scoped, tag = 'internal scratch']
  %s0 = inlined_call_operand.hbm [shape: f32[16,32], index: 0, kind: input, shape index: {}]
  %s1 = inlined_call_operand.hbm [shape: f32[32,256], index: 1, kind: input, shape index: {}]
  %s2 = inlined_call_operand.vmem [shape: f32[1,256], index: 2, kind: input, shape index: {}]
  %s3 = inlined_call_operand.hbm [shape: f32[256,128], index: 3, kind: input, shape index: {}]
  %s4 = inlined_call_operand.vmem [shape: f32[1,128], index: 4, kind: input, shape index: {}]
  %s5 = inlined_call_operand.hbm [shape: f32[16,128], index: 5, kind: output, shape index: {}]
  %s6 = sld [smem:[#allocation0]]
  $region42: #{tpu_custom_call.1} parent=0
    _
  %s8 = ssub.s32 1, %s6
  %s9 = scalar_select 0, %s8, %s6
  $region1: #{tpu_custom_call.1} parent=0
    #allocation2 [shape = 'u8[8192]{0}', space=vmem, size = 0x2000, scoped, tag = 'input window, operand 0, single buffered']
    #allocation3 [shape = 's32[1]{0}', space=sflag, size = 0x4, scoped, tag = 'scoped memory for tpu_custom_call.1']
    #allocation4 [shape = 's32[1]{0}', space=sflag, size = 0x4, scoped, tag = 'scoped memory for tpu_custom_call.1']
    #allocation5 [shape = 'u8[32768]{0}', space=vmem, size = 0x8000, scoped, tag = 'input window, operand 1, single buffered']
    #allocation6 [shape = 's32[1]{0}', space=sflag, size = 0x4, scoped, tag = 'scoped memory for tpu_custom_call.1']
    #allocation7 [shape = 'u8[131072]{0}', space=vmem, size = 0x20000, scoped, tag = 'input window, operand 3, single buffered']
    #allocation8 [shape = 'u8[8192]{0}', space=vmem, size = 0x2000, scoped, tag = 'output window, operand 0, single buffered']
    %10 = vsyncpa [#allocation3], 0
    %11 = vsyncpa [#allocation6], 0
    %12 = vsyncpa [#allocation4], 0
    // Predicated region
    $region2: #{tpu_custom_call.1} parent=1 // pred_check
      _
    $region3: #{tpu_custom_call.1} parent=1 // pred_check_branch
      %14 = sbr.rel (0) target = $region5
    $region4: #{tpu_custom_call.1} parent=1 // pred_region
      %s16 = ssub.s32 256, 256
      %17 = vsyncadd [#allocation3], %s16
      %s18 = sshll.u32 [#allocation2], 4
      %s19 = int_to_ptr.vmem [resolvable:$true] %s18
      %24 = dma.hbm_to_vmem [thread:$0]  %s0, 256, %s19, [#allocation3], 128, 128, 8
    $region5: #{tpu_custom_call.1} parent=1 // pred_fallthru
      _
    // Predicated region
    $region6: #{tpu_custom_call.1} parent=1 // pred_check
      _
    $region7: #{tpu_custom_call.1} parent=1 // pred_check_branch
      %26 = sbr.rel (0) target = $region9
    $region8: #{tpu_custom_call.1} parent=1 // pred_region
      %s28 = ssub.s32 1024, 1024
      %29 = vsyncadd [#allocation6], %s28
      %s30 = sshll.u32 [#allocation5], 4
      %s31 = int_to_ptr.vmem [resolvable:$true] %s30
      %36 = dma.hbm_to_vmem [thread:$0]  %s1, 1024, %s31, [#allocation6], 256, 256, 16
    $region9: #{tpu_custom_call.1} parent=1 // pred_fallthru
      _
    // Predicated region
    $region10: #{tpu_custom_call.1} parent=1 // pred_check
      _
    $region11: #{tpu_custom_call.1} parent=1 // pred_check_branch
      %38 = sbr.rel (0) target = $region13
    $region12: #{tpu_custom_call.1} parent=1 // pred_region
      _
    $region13: #{tpu_custom_call.1} parent=1 // pred_fallthru
      _
    // Predicated region
    $region14: #{tpu_custom_call.1} parent=1 // pred_check
      _
    $region15: #{tpu_custom_call.1} parent=1 // pred_check_branch
      %40 = sbr.rel (0) target = $region17
    $region16: #{tpu_custom_call.1} parent=1 // pred_region
      %s42 = ssub.s32 4096, 4096
      %43 = vsyncadd [#allocation6], %s42
      %s44 = sshll.u32 [#allocation7], 4
      %s45 = int_to_ptr.vmem [resolvable:$true] %s44
      %50 = dma.hbm_to_vmem [thread:$0]  %s3, 4096, %s45, [#allocation6], 128, 128, 8
    $region17: #{tpu_custom_call.1} parent=1 // pred_fallthru
      _
    // Predicated region
    $region18: #{tpu_custom_call.1} parent=1 // pred_check
      _
    $region19: #{tpu_custom_call.1} parent=1 // pred_check_branch
      %52 = sbr.rel (0) target = $region21
    $region20: #{tpu_custom_call.1} parent=1 // pred_region
      _
    $region21: #{tpu_custom_call.1} parent=1 // pred_fallthru
      _
    // Predicated region
    $region22: #{tpu_custom_call.1} parent=1 // pred_check
      _
    $region23: #{tpu_custom_call.1} parent=1 // pred_check_branch
      %54 = sbr.rel (0) target = $region25
    $region24: #{tpu_custom_call.1} parent=1 // pred_region
      %55 = dma.done [#allocation3], 256
    $region25: #{tpu_custom_call.1} parent=1 // pred_fallthru
      _
    // Predicated region
    $region26: #{tpu_custom_call.1} parent=1 // pred_check
      _
    $region27: #{tpu_custom_call.1} parent=1 // pred_check_branch
      %57 = sbr.rel (0) target = $region29
    $region28: #{tpu_custom_call.1} parent=1 // pred_region
      %58 = dma.done [#allocation6], 1024
    $region29: #{tpu_custom_call.1} parent=1 // pred_fallthru
      _
    // Predicated region
    $region30: #{tpu_custom_call.1} parent=1 // pred_check
      _
    $region31: #{tpu_custom_call.1} parent=1 // pred_check_branch
      %60 = sbr.rel (0) target = $region33
    $region32: #{tpu_custom_call.1} parent=1 // pred_region
      %61 = dma.done [#allocation6], 4096
    $region33: #{tpu_custom_call.1} parent=1 // pred_fallthru
      _
    %v62 = vld [vmem:[#allocation2] sm:$0xff]
    %v63 = vld [vmem:[#allocation2 + $0x8] sm:$0xff]
    %v64 = vld [vmem:[#allocation5] sm:$0xff]
    %v65 = vld [vmem:[#allocation5 + $0x8] sm:$0xff]
    %v66 = vld [vmem:[#allocation5 + $0x10] sm:$0xff]
    %v67 = vld [vmem:[#allocation5 + $0x18] sm:$0xff]
    %v68 = vld [vmem:[#allocation5 + $0x20] sm:$0xff]
    %v69 = vld [vmem:[#allocation5 + $0x28] sm:$0xff]
    %v70 = vld [vmem:[#allocation5 + $0x30] sm:$0xff]
    %v71 = vld [vmem:[#allocation5 + $0x38] sm:$0xff]
    %v72 = vld [vmem:[%s2] sm:$0x3]
    %v74 = vlaneseq
    %v75 = vshrl.u32 %v74, 7
    %v76 = vsub.s32 0, %v75
    %v77 = vrot.slane %v72, %v76
    %v78 = vlaneseq
    %v79 = vshrl.u32 %v78, 7
    %v80 = vsub.s32 1, %v79
    %v81 = vrot.slane %v72, %v80
    %vm84 = vcmask 261120
    %v86 = vsel %vm84, %v62, 0
    %v89 = vsel %vm84, %v63, 0
    %91 = vmatprep.subr.mxu0 0.0
    %92 = vmatpush1.msra.mxu0 0.0
    %93 = vmatprep.subr.mxu0 0.0
    %94 = vmatpush1.msra.mxu0 0.0
    %95 = vmatprep.subr.mxu0 0.0
    %96 = vmatpush1.msra.mxu0 0.0
    %97 = vmatprep.subr.mxu0 0.0
    %98 = vmatpush1.msra.mxu0 0.0
    %99 = vmatprep.subr.mxu0 0.0
    %100 = vmatpush1.msra.mxu0 0.0
    %101 = vmatprep.subr.mxu0 0.0
    %102 = vmatpush1.msra.mxu0 0.0
    %103 = vmatprep.subr.mxu0 0.0
    %104 = vmatpush1.msra.mxu0 0.0
    %105 = vmatprep.subr.mxu0 0.0
    %106 = vmatpush1.msra.mxu0 0.0
    %107 = vmatprep.subr.mxu0 0.0
    %108 = vmatpush1.msra.mxu0 0.0
    %109 = vmatprep.subr.mxu0 0.0
    %110 = vmatpush1.msra.mxu0 0.0
    %111 = vmatprep.subr.mxu0 0.0
    %112 = vmatpush1.msra.mxu0 0.0
    %113 = vmatprep.subr.mxu0 0.0
    %114 = vmatpush1.msra.mxu0 0.0
    %115 = vmatprep.subr.mxu0 %v71
    %116 = vmatpush1.msra.mxu0 %v70
    %117 = vmatprep.subr.mxu0 %v69
    %118 = vmatpush1.msra.mxu0 %v68
    %119 = vmatprep.subr.mxu0 %v67
    %120 = vmatpush1.msra.mxu0 %v66
    %121 = vmatprep.subr.mxu0 %v65
    %122 = vmatpush1.msra.mxu0 %v64
    %123 = vmatprep.subr.mxu0 0.0
    %124 = vmatpush2.msra.mxu0 0.0
    %125 = vmatprep.subr.mxu0 0.0
    %126 = vmatpush2.msra.mxu0 0.0
    %127 = vmatprep.subr.mxu0 0.0
    %128 = vmatpush2.msra.mxu0 0.0
    %129 = vmatprep.subr.mxu0 0.0
    %130 = vmatpush2.msra.mxu0 0.0
    %131 = vmatprep.subr.mxu0 0.0
    %132 = vmatpush2.msra.mxu0 0.0
    %133 = vmatprep.subr.mxu0 0.0
    %134 = vmatpush2.msra.mxu0 0.0
    %135 = vmatprep.subr.mxu0 0.0
    %136 = vmatpush2.msra.mxu0 0.0
    %137 = vmatprep.subr.mxu0 0.0
    %138 = vmatpush2.msra.mxu0 0.0
    %139 = vmatprep.subr.mxu0 0.0
    %140 = vmatpush2.msra.mxu0 0.0
    %141 = vmatprep.subr.mxu0 0.0
    %142 = vmatpush2.msra.mxu0 0.0
    %143 = vmatprep.subr.mxu0 0.0
    %144 = vmatpush2.msra.mxu0 0.0
    %145 = vmatprep.subr.mxu0 0.0
    %146 = vmatpush2.msra.mxu0 0.0
    %147 = vmatprep.subr.mxu0 0.0
    %148 = vmatpush2.msra.mxu0 0.0
    %149 = vmatprep.subr.mxu0 0.0
    %150 = vmatpush2.msra.mxu0 0.0
    %151 = vmatprep.subr.mxu0 0.0
    %152 = vmatpush2.msra.mxu0 0.0
    %153 = vmatprep.subr.mxu0 0.0
    %154 = vmatpush2.msra.mxu0 0.0
    %155 = vmatprep.mubr.f32.mxu0 0.0
    %156 = vmatmul.mubr.f32.gmra.mxu0 %v86
    %v157 = vpop.f32.mrf.mxu0
    %v158 = vadd.f32 %v77, %v157
    %v159 = vpop.f32.mrf.mxu0
    %v160 = vadd.f32 %v81, %v159
    %161 = vmatprep.mubr.f32.mxu0 0.0
    %162 = vmatmul.mubr.f32.gmra.mxu0 %v89
    %v163 = vpop.f32.mrf.mxu0
    %v164 = vadd.f32 %v77, %v163
    %v165 = vpop.f32.mrf.mxu0
    %v166 = vadd.f32 %v81, %v165
    %167 = vdwg.mxu0
    %v168 = vld [vmem:[#allocation7] sm:$0xff]
    %v169 = vld [vmem:[#allocation7 + $0x8] sm:$0xff]
    %v170 = vld [vmem:[#allocation7 + $0x10] sm:$0xff]
    %v171 = vld [vmem:[#allocation7 + $0x18] sm:$0xff]
    %v172 = vld [vmem:[#allocation7 + $0x20] sm:$0xff]
    %v173 = vld [vmem:[#allocation7 + $0x28] sm:$0xff]
    %v174 = vld [vmem:[#allocation7 + $0x30] sm:$0xff]
    %v175 = vld [vmem:[#allocation7 + $0x38] sm:$0xff]
    %v176 = vld [vmem:[#allocation7 + $0x40] sm:$0xff]
    %v177 = vld [vmem:[#allocation7 + $0x48] sm:$0xff]
    %v178 = vld [vmem:[#allocation7 + $0x50] sm:$0xff]
    %v179 = vld [vmem:[#allocation7 + $0x58] sm:$0xff]
    %v180 = vld [vmem:[#allocation7 + $0x60] sm:$0xff]
    %v181 = vld [vmem:[#allocation7 + $0x68] sm:$0xff]
    %v182 = vld [vmem:[#allocation7 + $0x70] sm:$0xff]
    %v183 = vld [vmem:[#allocation7 + $0x78] sm:$0xff]
    %v184 = vld [vmem:[#allocation7 + $0x80] sm:$0xff]
    %v185 = vld [vmem:[#allocation7 + $0x88] sm:$0xff]
    %v186 = vld [vmem:[#allocation7 + $0x90] sm:$0xff]
    %v187 = vld [vmem:[#allocation7 + $0x98] sm:$0xff]
    %v188 = vld [vmem:[#allocation7 + $0xa0] sm:$0xff]
    %v189 = vld [vmem:[#allocation7 + $0xa8] sm:$0xff]
    %v190 = vld [vmem:[#allocation7 + $0xb0] sm:$0xff]
    %v191 = vld [vmem:[#allocation7 + $0xb8] sm:$0xff]
    %v192 = vld [vmem:[#allocation7 + $0xc0] sm:$0xff]
    %v193 = vld [vmem:[#allocation7 + $0xc8] sm:$0xff]
    %v194 = vld [vmem:[#allocation7 + $0xd0] sm:$0xff]
    %v195 = vld [vmem:[#allocation7 + $0xd8] sm:$0xff]
    %v196 = vld [vmem:[#allocation7 + $0xe0] sm:$0xff]
    %v197 = vld [vmem:[#allocation7 + $0xe8] sm:$0xff]
    %v198 = vld [vmem:[#allocation7 + $0xf0] sm:$0xff]
    %v199 = vld [vmem:[#allocation7 + $0xf8] sm:$0xff]
    %v200 = vld [vmem:[%s4] sm:$0x1]
    %v202 = vlaneseq
    %v203 = vshrl.u32 %v202, 7
    %v204 = vsub.s32 0, %v203
    %v205 = vrot.slane %v200, %v204
    %207 = vmatprep.subr.mxu0 0.0
    %208 = vmatpush1.msra.mxu0 %v183
    %209 = vmatprep.subr.mxu0 0.0
    %210 = vmatpush1.msra.mxu0 %v182
    %211 = vmatprep.subr.mxu0 0.0
    %212 = vmatpush1.msra.mxu0 %v181
    %213 = vmatprep.subr.mxu0 0.0
    %214 = vmatpush1.msra.mxu0 %v180
    %215 = vmatprep.subr.mxu0 0.0
    %216 = vmatpush1.msra.mxu0 %v179
    %217 = vmatprep.subr.mxu0 0.0
    %218 = vmatpush1.msra.mxu0 %v178
    %219 = vmatprep.subr.mxu0 0.0
    %220 = vmatpush1.msra.mxu0 %v177
    %221 = vmatprep.subr.mxu0 0.0
    %222 = vmatpush1.msra.mxu0 %v176
    %223 = vmatprep.subr.mxu0 0.0
    %224 = vmatpush1.msra.mxu0 %v175
    %225 = vmatprep.subr.mxu0 0.0
    %226 = vmatpush1.msra.mxu0 %v174
    %227 = vmatprep.subr.mxu0 0.0
    %228 = vmatpush1.msra.mxu0 %v173
    %229 = vmatprep.subr.mxu0 0.0
    %230 = vmatpush1.msra.mxu0 %v172
    %231 = vmatprep.subr.mxu0 0.0
    %232 = vmatpush1.msra.mxu0 %v171
    %233 = vmatprep.subr.mxu0 0.0
    %234 = vmatpush1.msra.mxu0 %v170
    %235 = vmatprep.subr.mxu0 0.0
    %236 = vmatpush1.msra.mxu0 %v169
    %237 = vmatprep.subr.mxu0 0.0
    %238 = vmatpush1.msra.mxu0 %v168
    %239 = vmatprep.subr.mxu0 0.0
    %240 = vmatpush2.msra.mxu0 %v199
    %241 = vmatprep.subr.mxu0 0.0
    %242 = vmatpush2.msra.mxu0 %v198
    %243 = vmatprep.subr.mxu0 0.0
    %244 = vmatpush2.msra.mxu0 %v197
    %245 = vmatprep.subr.mxu0 0.0
    %246 = vmatpush2.msra.mxu0 %v196
    %247 = vmatprep.subr.mxu0 0.0
    %248 = vmatpush2.msra.mxu0 %v195
    %249 = vmatprep.subr.mxu0 0.0
    %250 = vmatpush2.msra.mxu0 %v194
    %251 = vmatprep.subr.mxu0 0.0
    %252 = vmatpush2.msra.mxu0 %v193
    %253 = vmatprep.subr.mxu0 0.0
    %254 = vmatpush2.msra.mxu0 %v192
    %255 = vmatprep.subr.mxu0 0.0
    %256 = vmatpush2.msra.mxu0 %v191
    %257 = vmatprep.subr.mxu0 0.0
    %258 = vmatpush2.msra.mxu0 %v190
    %259 = vmatprep.subr.mxu0 0.0
    %260 = vmatpush2.msra.mxu0 %v189
    %261 = vmatprep.subr.mxu0 0.0
    %262 = vmatpush2.msra.mxu0 %v188
    %263 = vmatprep.subr.mxu0 0.0
    %264 = vmatpush2.msra.mxu0 %v187
    %265 = vmatprep.subr.mxu0 0.0
    %266 = vmatpush2.msra.mxu0 %v186
    %267 = vmatprep.subr.mxu0 0.0
    %268 = vmatpush2.msra.mxu0 %v185
    %269 = vmatprep.subr.mxu0 0.0
    %270 = vmatpush2.msra.mxu0 %v184
    %271 = vmatprep.mubr.f32.mxu0 %v160
    %272 = vmatmul.mubr.f32.gmra.mxu0 %v158
    %v273 = vpop.f32.mrf.mxu0
    %v274 = vadd.f32 %v205, %v273
    %v275 = vpop.f32.mrf.mxu0
    %276 = vmatprep.mubr.f32.mxu0 %v166
    %277 = vmatmul.mubr.f32.gmra.mxu0 %v164
    %v278 = vpop.f32.mrf.mxu0
    %v279 = vadd.f32 %v205, %v278
    %v280 = vpop.f32.mrf.mxu0
    %281 = vdwg.mxu0
    %282 = vst [vmem:[#allocation8] sm:$0xff] %v274
    %283 = vst [vmem:[#allocation8 + $0x8] sm:$0xff] %v279
    // Predicated region
    $region34: #{tpu_custom_call.1} parent=1 // pred_check
      _
    $region35: #{tpu_custom_call.1} parent=1 // pred_check_branch
      %285 = sbr.rel (0) target = $region37
    $region36: #{tpu_custom_call.1} parent=1 // pred_region
      %s287 = ssub.s32 256, 256
      %288 = vsyncadd [#allocation4], %s287
      %s289 = sshll.u32 [#allocation8], 4
      %s290 = int_to_ptr.vmem [resolvable:$true] %s289
      %295 = dma.vmem_to_hbm [thread:$0]  %s290, 256, %s5, [#allocation4], 128, 128, 8
    $region37: #{tpu_custom_call.1} parent=1 // pred_fallthru
      _
    // Predicated region
    $region38: #{tpu_custom_call.1} parent=1 // pred_check
      _
    $region39: #{tpu_custom_call.1} parent=1 // pred_check_branch
      %297 = sbr.rel (0) target = $region41
    $region40: #{tpu_custom_call.1} parent=1 // pred_region
      %298 = dma.done [#allocation4], 256
    $region41: #{tpu_custom_call.1} parent=1 // pred_fallthru
      _
    %299 = vsyncpa [#allocation3], 1
    %300 = vsyncpa [#allocation6], 1
    %301 = vsyncpa [#allocation4], 1

</llo_original>
